<compile_context>
chip_gen: v7x
topology: tpu7x:2x2x1
jax: 0.10.0
libtpu: 0.0.40
codegen_flags: <defaults>
</compile_context>

<pallas_src>
import numpy as np

import jax
import jax.numpy as jnp
from jax.experimental import pallas as pl
from jax.experimental.pallas import tpu as pltpu


# ----------------------------------------------------------------------------
# Kernel bodies
# ----------------------------------------------------------------------------

def _dma_copy_kernel(x_hbm, o_hbm, sem):
    # Single HBM->HBM DMA of the whole array: no VMEM round trip, no per-step
    # overhead.  The DMA engine streams at (close to) the HBM roofline.
    cp = pltpu.make_async_copy(x_hbm, o_hbm, sem)
    cp.start()
    cp.wait()


def _vmem_copy_kernel(x_ref, o_ref):
    # Bare streaming copy of one (tb, tf) tile; keep the body empty of any
    # VALU decoration so HBM bandwidth / the store slot is the only binding
    # resource.
    o_ref[...] = x_ref[...]


# ----------------------------------------------------------------------------
# Generation-aware sizing helpers
# ----------------------------------------------------------------------------

def _vmem_budget_bytes():
    """Scoped-VMEM budget to request, derived from the actual part.

    v5e/v6e have 128 MiB physical VMEM -> 64 MiB budget; v7x has 64 MiB
    physical -> 32 MiB budget.  Setting vmem_limit_bytes explicitly means the
    per-generation scoped defaults (16/32 MiB) never bind.
    """
    vmem_bytes = 64 << 20  # conservative default (v7x-sized)
    try:
        info = pltpu.get_tpu_info()
        cap = getattr(info, "vmem_capacity_bytes", None)
        if cap:
            vmem_bytes = int(cap)
    except Exception:
        pass
    return min(vmem_bytes // 2, 64 << 20)


def _pick_tiles(b, flat, itemsize, tile_cap_bytes):
    """Choose (tb, tf) for the tiled VMEM fallback path.

    tf: full row if a minimal-height tile fits the cap (one contiguous DMA per
        buffer, fully lane-dense unmasked stores); otherwise the largest
        128-multiple that fits, with a cdiv grid handling the partial last
        block.
    tb: multiple of the dtype's packed sublane tile (8/16/32), or the full
        batch extent when b is smaller than that.
    """
    sub = max(8, 32 // itemsize)  # packed sublane tile: f32->8, bf16->16, i8->32

    if sub * flat * itemsize <= tile_cap_bytes:
        tf = flat                                  # full row, one long DMA
    else:
        tf = (tile_cap_bytes // (sub * itemsize)) // 128 * 128
        tf = max(128, min(tf, pl.cdiv(flat, 128) * 128))

    if b <= sub:
        tb = b                                     # full extent (always legal)
    else:
        tb = (tile_cap_bytes // (tf * itemsize)) // sub * sub
        tb = max(sub, min(tb, (b // sub) * sub))
    return tb, tf


# ----------------------------------------------------------------------------
# Public wrapper
# ----------------------------------------------------------------------------

def unflatten(x, channel_dim, height, width, *,
              materialize=True, donate=False, use_dma=True):
    """Pallas equivalent of UnFlatten(channel_dim, height, width).forward(x).

    x: (B, C*H*W) array.  Returns (B, C, H, W) with identical data/dtype.

    materialize=False -> metadata-only reshape (the true optimum, matches
                         torch .view(): zero HBM traffic).
    donate=True       -> caller promises never to read x again; an identity
                         copy is pure waste, so this also fast-paths to the
                         metadata-only reshape.
    use_dma=True      -> HBM->HBM DMA copy (default materialized path).
    use_dma=False     -> tiled, double-buffered VMEM streaming copy.
    """
    b, flat = x.shape
    assert flat == channel_dim * height * width, (
        f"flat dim {flat} != {channel_dim}*{height}*{width}")

    if not materialize or donate:
        # Metadata-only: no kernel, no HBM traffic.
        return x.reshape(b, channel_dim, height, width)

    itemsize = np.dtype(x.dtype).itemsize
    cost = pl.CostEstimate(flops=0, transcendentals=0,
                           bytes_accessed=2 * b * flat * itemsize)

    if use_dma:
        # --- HBM -> HBM DMA path: no VMEM staging, no grid overhead. -------
        out_flat = pl.pallas_call(
            _dma_copy_kernel,
            out_shape=jax.ShapeDtypeStruct((b, flat), x.dtype),
            in_specs=[pl.BlockSpec(memory_space=pl.ANY)],
            out_specs=pl.BlockSpec(memory_space=pl.ANY),
            scratch_shapes=[pltpu.SemaphoreType.DMA],
            cost_estimate=cost,
        )(x)
    else:
        # --- Tiled VMEM streaming copy (fallback path). ---------------------
        budget = _vmem_budget_bytes()
        # 2 buffers x (in + out) tiles must fit with headroom.
        tile_cap = max(128 * 8 * itemsize, budget // 6)
        tb, tf = _pick_tiles(b, flat, itemsize, tile_cap)

        nb = pl.cdiv(b, tb)
        nf = pl.cdiv(flat, tf)

        # 1-D grid over all tiles so a "parallel" axis of extent >= 2 exists
        # whenever there is more than one tile (lets v7x shard the stream
        # across both TensorCores even when b//tb == 1).
        out_flat = pl.pallas_call(
            _vmem_copy_kernel,
            out_shape=jax.ShapeDtypeStruct((b, flat), x.dtype),
            grid=(nb * nf,),
            in_specs=[pl.BlockSpec((tb, tf), lambda i: (i // nf, i % nf))],
            out_specs=pl.BlockSpec((tb, tf), lambda i: (i // nf, i % nf)),
            compiler_params=pltpu.CompilerParams(
                dimension_semantics=("parallel",),
                vmem_limit_bytes=budget,
            ),
            cost_estimate=cost,
        )(x)

    # Row-major contiguous (B, C*H*W) -> (B, C, H, W) is metadata-only in XLA:
    # no extra HBM pass after the kernel.
    return out_flat.reshape(b, channel_dim, height, width)


# ----------------------------------------------------------------------------
# Self-test
# ----------------------------------------------------------------------------

if __name__ == "__main__":
    # Shapes implied by the module: batch=2, channel_dim=4, height=16, width=16.
    B, C, H, W = 2, 4, 16, 16
    key = jax.random.PRNGKey(0)
    x = jax.random.normal(key, (B, C * H * W), dtype=jnp.float32)

    # Reference: pure-JAX reshape (semantically identical to torch .view()).
    ref = x.reshape(B, C, H, W)

    # Default path: HBM->HBM DMA copy kernel.
    out_dma = jax.block_until_ready(unflatten(x, C, H, W))
    assert out_dma.shape == (B, C, H, W)
    assert out_dma.dtype == x.dtype
    assert bool(jnp.array_equal(out_dma, ref))

    # Fallback path: tiled, double-buffered VMEM streaming copy.
    out_vmem = jax.block_until_ready(unflatten(x, C, H, W, use_dma=False))
    assert bool(jnp.array_equal(out_vmem, ref))

    # Zero-copy paths (true optimum / donate fast-path).
    out_view = jax.block_until_ready(unflatten(x, C, H, W, materialize=False))
    assert bool(jnp.array_equal(out_view, ref))
    out_don = jax.block_until_ready(unflatten(x, C, H, W, donate=True))
    assert bool(jnp.array_equal(out_don, ref))

    print("KERNEL_OK")
</pallas_src>

<mosaic_0001>
module attributes {stable_mosaic.version = 11 : i64} {
  func.func @_dma_copy_kernel(%arg0: memref<2x1024xf32, #tpu.memory_space<any>>, %arg1: memref<2x1024xf32, #tpu.memory_space<any>>, %arg2: memref<!tpu.dma_semaphore, #tpu.memory_space<semaphore_mem>>) attributes {dimension_semantics = [], scalar_prefetch = 0 : i64, scratch_operands = 1 : i64, tpu.core_type = #tpu.core_type<tc>} {
    tpu.enqueue_dma source(%arg0 : memref<2x1024xf32, #tpu.memory_space<any>>) target(%arg1 : memref<2x1024xf32, #tpu.memory_space<any>>) target_semaphore(%arg2 : memref<!tpu.dma_semaphore, #tpu.memory_space<semaphore_mem>>)
    tpu.wait_dma2 semaphore(%arg2 : memref<!tpu.dma_semaphore, #tpu.memory_space<semaphore_mem>>) src(%arg0 : memref<2x1024xf32, #tpu.memory_space<any>>) dst(%arg1 : memref<2x1024xf32, #tpu.memory_space<any>>)
    return
  }
}

</mosaic_0001>

<llo_original>
// kernel: tpu_custom_call.1
$region0: #{tpu_custom_call.1}
  #allocation0 [shape = 'u32[]', space=smem, size = 0x4, offset = 0x4, fixed_abs, tag = 'smem constant byte address 0x4 - core index']
  #allocation1 [shape = 'u32[144,128]{1,0:T(1,128)}', space=vmem, size = 0x12000, scoped, tag = 'internal scratch']
  #allocation2 [shape = 's32[1]{0}', space=sflag, size = 0x4, scoped, tag = 'scratch operand']
  #allocation3 [shape = 's32[]', space=sflag, size = 0x4, offset = 0, fixed_abs, tag = 'sflag constant byte address 0x0 - dummy sync flag']
  #allocation4 [shape = 'u32[0]{0}', space=smem, size = 0, offset = 0, fixed_abs, tag = 'smem constant byte address 0x0 - null']
  %s0 = inlined_call_operand.hbm [shape: f32[2,1024], index: 0, kind: input, shape index: {}]
  %s1 = inlined_call_operand.hbm [shape: f32[2,1024], index: 1, kind: output, shape index: {}]
  %s2 = sld [smem:[#allocation0]]
  $region2: #{tpu_custom_call.1} parent=0
    _
  %s4 = ssub.s32 1, %s2
  %s5 = scalar_select 0, %s4, %s2
  %s7 = sshll.u32 1, 14
  %s8 = sxor.u32 4294967295, %s7
  %s11 = sshll.u32 3, 24
  %s12 = sxor.u32 4294967295, %s11
  %s13 = sand.u32 0, %s12
  %s15 = sor.u32 %s13, 0
  %18 = dma.general %s0, 256, %s1, [#allocation2], [#allocation3], [#allocation4], %s15, 0
  %s19 = smul.u32 2, 1
  %s20 = smul.u32 %s19, 8
  %s21 = sshll.u32 %s20, 4
  %22 = dma.done [#allocation2], %s21
  %23 = vsyncmov [#allocation2]
  %s24 = vpop.sfrf %23
  %p25 = scmp.eq.s32.totalorder %s24, 0
  %p26 = pneg %p25
  %28 = shalt.err (%p26)

</llo_original>
